<compile_context>
chip_gen: v5e
topology: v5e:2x2
jax: 0.10.0
libtpu: 0.0.40
codegen_flags: <defaults>
</compile_context>

<pallas_src>
import functools

import jax
import jax.numpy as jnp
from jax.experimental import pallas as pl
from jax.experimental.pallas import tpu as pltpu


def _round_up(x: int, m: int) -> int:
    return ((x + m - 1) // m) * m


def _make_fused_mlp_kernel(num_layers: int, apply_relu: tuple):
    """Fused kernel: x -> [matmul(bf16) + bias(f32) (+ReLU)] * num_layers -> out.

    Ref order: x_ref, (w_ref, b_ref) * num_layers, o_ref.
    All refs are whole, lane-dense padded VMEM slabs; intermediates live in
    vregs (no VMEM scratch round-trip).
    """

    def kernel(*refs):
        x_ref = refs[0]
        wb_refs = refs[1 : 1 + 2 * num_layers]
        o_ref = refs[1 + 2 * num_layers]

        h = x_ref[...]                                  # f32 activations
        for l in range(num_layers):
            w = wb_refs[2 * l][...]                     # bf16 weight slab
            b = wb_refs[2 * l + 1][...]                 # f32 bias row
            y = jnp.dot(h.astype(jnp.bfloat16), w,
                        preferred_element_type=jnp.float32)
            y = y + b                                   # f32 epilogue
            if apply_relu[l]:
                y = jnp.maximum(y, 0.0)
            h = y                                       # stays in vregs
        o_ref[...] = h.astype(o_ref.dtype)

    return kernel


def prepare_mlp_params(params):
    """ONE-TIME padding/casting of (w_t, b) params to lane-dense slabs.

    Weights -> bf16 padded to (128k_in, 128k_out); biases -> f32 (1, 128k_out).
    Zero padding is mathematically inert (padded cols/rows contribute 0,
    ReLU(0)=0); the wrapper slices the real output back out.
    """
    dims = [params[0][0].shape[0]] + [w_t.shape[1] for (w_t, _) in params]
    dims_pad = [_round_up(d, 128) for d in dims]

    padded = []
    for l, (w_t, b) in enumerate(params):
        fi, fo = w_t.shape
        w_pad = (
            jnp.zeros((dims_pad[l], dims_pad[l + 1]), jnp.bfloat16)
            .at[:fi, :fo]
            .set(w_t.astype(jnp.bfloat16))
        )
        b_pad = (
            jnp.zeros((1, dims_pad[l + 1]), jnp.float32)
            .at[0, :fo]
            .set(b.astype(jnp.float32))
        )
        padded.extend([w_pad, b_pad])
    return tuple(padded), tuple(dims), tuple(dims_pad)


@functools.partial(jax.jit, static_argnames=("apply_relu", "out_features"))
def mlp_forward(x, padded_args, apply_relu, out_features):
    """x: (B, C, H, W) -> Flatten -> fused Linear/ReLU stack in one kernel."""
    num_layers = len(apply_relu)
    B = x.shape[0]
    xf = x.reshape(B, -1).astype(jnp.float32)   # nn.Flatten(): row-major view
    IN = xf.shape[1]
    IN_pad = padded_args[0].shape[0]
    OUT_pad = padded_args[-1].shape[1]
    B_pad = _round_up(B, 8)                     # f32 sublane granularity

    # Zero-pad input rows/cols (inert; sliced away). Fuses with launch under jit.
    x_pad = jnp.zeros((B_pad, IN_pad), jnp.float32).at[:B, :IN].set(xf)

    kernel = _make_fused_mlp_kernel(num_layers, apply_relu)

    # No grid, whole-array single-buffered VMEM slabs (nothing to pipeline).
    vmem_spec = pl.BlockSpec(memory_space=pltpu.MemorySpace.VMEM)
    out_pad = pl.pallas_call(
        kernel,
        out_shape=jax.ShapeDtypeStruct((B_pad, OUT_pad), jnp.float32),
        in_specs=[vmem_spec] * (1 + len(padded_args)),
        out_specs=vmem_spec,
    )(x_pad, *padded_args)

    return out_pad[:B, :out_features]


def init_mlp_params(key, layers):
    """Deterministic init mimicking nn.Linear default: U(-1/sqrt(in), 1/sqrt(in))."""
    params = []
    for (fan_in, fan_out) in layers:
        key, kw, kb = jax.random.split(key, 3)
        bound = 1.0 / jnp.sqrt(jnp.float32(fan_in))
        # PyTorch weight shape is (out, in); store transposed (in, out) for the kernel.
        w_t = jax.random.uniform(kw, (fan_in, fan_out), jnp.float32, -bound, bound)
        b = jax.random.uniform(kb, (fan_out,), jnp.float32, -bound, bound)
        params.append((w_t, b))
    return params


if __name__ == "__main__":
    # Module config: layers=[(64, 32), (32, 16)], dropout=[0.5, None],
    # activations=["relu", None]  (dropout is identity at inference).
    layers = [(64, 32), (32, 16)]
    activations = ["relu", None]
    apply_relu = tuple(a is not None for a in activations)

    key = jax.random.PRNGKey(0)
    key, kx = jax.random.split(key)
    # B=2, C=4, H=W=4  ->  flatten to (2, 64) matching layers[0][0] = 64.
    x = jax.random.normal(kx, (2, 4, 4, 4), dtype=jnp.float32)

    params = init_mlp_params(key, layers)

    # One-time padding/casting of params (not per forward call).
    padded_args, dims, dims_pad = prepare_mlp_params(params)
    out_features = dims[-1]

    out = mlp_forward(x, padded_args, apply_relu, out_features)
    out = jax.block_until_ready(out)

    # Reference in plain JAX mimicking the kernel's bf16-operand / f32-accum math.
    ref = x.reshape(2, -1).astype(jnp.float32)
    for (w_t, b), relu in zip(params, apply_relu):
        ref = jnp.dot(ref.astype(jnp.bfloat16), w_t.astype(jnp.bfloat16),
                      preferred_element_type=jnp.float32) + b.astype(jnp.float32)
        if relu:
            ref = jnp.maximum(ref, 0.0)

    assert out.shape == (2, 16)
    assert jnp.allclose(out, ref, atol=1e-3, rtol=1e-3)

    print("KERNEL_OK")
</pallas_src>

<mosaic_0001>
module attributes {stable_mosaic.version = 11 : i64} {
  func.func @kernel(%arg0: memref<8x128xf32, #tpu.memory_space<vmem>>, %arg1: memref<128x128xbf16, #tpu.memory_space<vmem>>, %arg2: memref<1x128xf32, #tpu.memory_space<vmem>>, %arg3: memref<128x128xbf16, #tpu.memory_space<vmem>>, %arg4: memref<1x128xf32, #tpu.memory_space<vmem>>, %arg5: memref<8x128xf32, #tpu.memory_space<vmem>>) attributes {dimension_semantics = [], scalar_prefetch = 0 : i64, scratch_operands = 0 : i64, tpu.core_type = #tpu.core_type<tc>} {
    %c0 = arith.constant 0 : index
    %c0_0 = arith.constant 0 : index
    %0 = vector.load %arg0[%c0, %c0_0] : memref<8x128xf32, #tpu.memory_space<vmem>>, vector<8x128xf32>
    %c0_1 = arith.constant 0 : index
    %c0_2 = arith.constant 0 : index
    %1 = vector.load %arg1[%c0_1, %c0_2] : memref<128x128xbf16, #tpu.memory_space<vmem>>, vector<128x128xbf16>
    %c0_3 = arith.constant 0 : index
    %c0_4 = arith.constant 0 : index
    %2 = vector.load %arg2[%c0_3, %c0_4] : memref<1x128xf32, #tpu.memory_space<vmem>>, vector<1x128xf32>
    %3 = arith.truncf %0 : vector<8x128xf32> to vector<8x128xbf16>
    %cst = arith.constant dense<0.000000e+00> : vector<8x128xf32>
    %4 = tpu.matmul %3, %1, %cst {dimension_numbers = #tpu.dot_dimension_numbers<[1], [0], [0], [1], [0, 0, 1, 1], [], []>} : vector<8x128xbf16>, vector<128x128xbf16>, vector<8x128xf32> -> vector<8x128xf32>
    %5 = vector.broadcast %2 : vector<1x128xf32> to vector<8x128xf32>
    %6 = arith.addf %4, %5 : vector<8x128xf32>
    %cst_5 = arith.constant 0.000000e+00 : f32
    %7 = vector.broadcast %cst_5 : f32 to vector<8x128xf32>
    %8 = arith.maximumf %6, %7 : vector<8x128xf32>
    %c0_6 = arith.constant 0 : index
    %c0_7 = arith.constant 0 : index
    %9 = vector.load %arg3[%c0_6, %c0_7] : memref<128x128xbf16, #tpu.memory_space<vmem>>, vector<128x128xbf16>
    %c0_8 = arith.constant 0 : index
    %c0_9 = arith.constant 0 : index
    %10 = vector.load %arg4[%c0_8, %c0_9] : memref<1x128xf32, #tpu.memory_space<vmem>>, vector<1x128xf32>
    %11 = arith.truncf %8 : vector<8x128xf32> to vector<8x128xbf16>
    %cst_10 = arith.constant dense<0.000000e+00> : vector<8x128xf32>
    %12 = tpu.matmul %11, %9, %cst_10 {dimension_numbers = #tpu.dot_dimension_numbers<[1], [0], [0], [1], [0, 0, 1, 1], [], []>} : vector<8x128xbf16>, vector<128x128xbf16>, vector<8x128xf32> -> vector<8x128xf32>
    %13 = vector.broadcast %10 : vector<1x128xf32> to vector<8x128xf32>
    %14 = arith.addf %12, %13 : vector<8x128xf32>
    %c0_11 = arith.constant 0 : index
    %c0_12 = arith.constant 0 : index
    %15 = vector.load %arg5[%c0_11, %c0_12] : memref<8x128xf32, #tpu.memory_space<vmem>>, vector<8x128xf32>
    tpu.vector_store %arg5[%c0_11, %c0_12], %14 {strides = array<i32>} : memref<8x128xf32, #tpu.memory_space<vmem>>, vector<8x128xf32>,
    return
  }
}

</mosaic_0001>

<llo_original>
// kernel: mlp_forward.1
$region0: #{mlp_forward.1}
  #allocation0 [shape = 'u32[]', space=smem, size = 0x4, offset = 0x4, fixed_abs, tag = 'smem constant byte address 0x4 - core index']
  #allocation1 [shape = 'u32[72,128]{1,0:T(1,128)}', space=vmem, size = 0x9000, scoped, tag = 'internal scratch']
  %s0 = inlined_call_operand.vmem [shape: f32[8,128], index: 0, kind: input, shape index: {}]
  %s1 = inlined_call_operand.hbm [shape: bf16[128,128], index: 1, kind: input, shape index: {}]
  %s2 = inlined_call_operand.vmem [shape: f32[1,128], index: 2, kind: input, shape index: {}]
  %s3 = inlined_call_operand.hbm [shape: bf16[128,128], index: 3, kind: input, shape index: {}]
  %s4 = inlined_call_operand.vmem [shape: f32[1,128], index: 4, kind: input, shape index: {}]
  %s5 = inlined_call_operand.vmem [shape: f32[8,128], index: 5, kind: output, shape index: {}]
  %s6 = sld [smem:[#allocation0]]
  $region38: #{mlp_forward.1} parent=0
    _
  %s8 = ssub.s32 1, %s6
  %s9 = scalar_select 0, %s8, %s6
  $region1: #{mlp_forward.1} parent=0
    #allocation2 [shape = 'u8[32768]{0}', space=vmem, size = 0x8000, scoped, tag = 'input window, operand 1, single buffered']
    #allocation3 [shape = 's32[1]{0}', space=sflag, size = 0x4, scoped, tag = 'scoped memory for mlp_forward.1']
    #allocation4 [shape = 'u8[32768]{0}', space=vmem, size = 0x8000, scoped, tag = 'input window, operand 3, single buffered']
    #allocation5 [shape = 's32[1]{0}', space=sflag, size = 0x4, scoped, tag = 'scoped memory for mlp_forward.1']
    %10 = vsyncpa [#allocation3], 0
    %11 = vsyncpa [#allocation5], 0
    // Predicated region
    $region2: #{mlp_forward.1} parent=1 // pred_check
      _
    $region3: #{mlp_forward.1} parent=1 // pred_check_branch
      %13 = sbr.rel (0) target = $region5
    $region4: #{mlp_forward.1} parent=1 // pred_region
      _
    $region5: #{mlp_forward.1} parent=1 // pred_fallthru
      _
    // Predicated region
    $region6: #{mlp_forward.1} parent=1 // pred_check
      _
    $region7: #{mlp_forward.1} parent=1 // pred_check_branch
      %15 = sbr.rel (0) target = $region9
    $region8: #{mlp_forward.1} parent=1 // pred_region
      %17 = vsyncadd [#allocation3], 0
      %s18 = sshll.u32 %s1, 4
      %s19 = int_to_ptr.hbm [resolvable:$true] %s18
      %s20 = sshll.u32 [#allocation2], 4
      %s21 = int_to_ptr.vmem [resolvable:$true] %s20
      %26 = dma.hbm_to_vmem [thread:$0]  %s19, 1024, %s21, [#allocation3], 64, 64, 4
    $region9: #{mlp_forward.1} parent=1 // pred_fallthru
      _
    // Predicated region
    $region10: #{mlp_forward.1} parent=1 // pred_check
      _
    $region11: #{mlp_forward.1} parent=1 // pred_check_branch
      %28 = sbr.rel (0) target = $region13
    $region12: #{mlp_forward.1} parent=1 // pred_region
      _
    $region13: #{mlp_forward.1} parent=1 // pred_fallthru
      _
    // Predicated region
    $region14: #{mlp_forward.1} parent=1 // pred_check
      _
    $region15: #{mlp_forward.1} parent=1 // pred_check_branch
      %30 = sbr.rel (0) target = $region17
    $region16: #{mlp_forward.1} parent=1 // pred_region
      %32 = vsyncadd [#allocation5], 0
      %s33 = sshll.u32 %s3, 4
      %s34 = int_to_ptr.hbm [resolvable:$true] %s33
      %s35 = sshll.u32 [#allocation4], 4
      %s36 = int_to_ptr.vmem [resolvable:$true] %s35
      %41 = dma.hbm_to_vmem [thread:$0]  %s34, 1024, %s36, [#allocation5], 64, 64, 4
    $region17: #{mlp_forward.1} parent=1 // pred_fallthru
      _
    // Predicated region
    $region18: #{mlp_forward.1} parent=1 // pred_check
      _
    $region19: #{mlp_forward.1} parent=1 // pred_check_branch
      %43 = sbr.rel (0) target = $region21
    $region20: #{mlp_forward.1} parent=1 // pred_region
      _
    $region21: #{mlp_forward.1} parent=1 // pred_fallthru
      _
    // Predicated region
    $region22: #{mlp_forward.1} parent=1 // pred_check
      _
    $region23: #{mlp_forward.1} parent=1 // pred_check_branch
      %45 = sbr.rel (0) target = $region25
    $region24: #{mlp_forward.1} parent=1 // pred_region
      %47 = dma.done [#allocation3], 1024
    $region25: #{mlp_forward.1} parent=1 // pred_fallthru
      _
    // Predicated region
    $region26: #{mlp_forward.1} parent=1 // pred_check
      _
    $region27: #{mlp_forward.1} parent=1 // pred_check_branch
      %49 = sbr.rel (0) target = $region29
    $region28: #{mlp_forward.1} parent=1 // pred_region
      %51 = dma.done [#allocation5], 1024
    $region29: #{mlp_forward.1} parent=1 // pred_fallthru
      _
    %v52 = vld [vmem:[%s0] sm:$0xff]
    %v53 = vld [vmem:[#allocation2] sm:$0xf]
    %v54 = vld [vmem:[#allocation2 + $0x4] sm:$0xf]
    %v55 = vld [vmem:[#allocation2 + $0x8] sm:$0xf]
    %v56 = vld [vmem:[#allocation2 + $0xc] sm:$0xf]
    %v57 = vld [vmem:[#allocation2 + $0x10] sm:$0xf]
    %v58 = vld [vmem:[#allocation2 + $0x14] sm:$0xf]
    %v59 = vld [vmem:[#allocation2 + $0x18] sm:$0xf]
    %v60 = vld [vmem:[#allocation2 + $0x1c] sm:$0xf]
    %v61 = vld [vmem:[#allocation2 + $0x20] sm:$0xf]
    %v62 = vld [vmem:[#allocation2 + $0x24] sm:$0xf]
    %v63 = vld [vmem:[#allocation2 + $0x28] sm:$0xf]
    %v64 = vld [vmem:[#allocation2 + $0x2c] sm:$0xf]
    %v65 = vld [vmem:[#allocation2 + $0x30] sm:$0xf]
    %v66 = vld [vmem:[#allocation2 + $0x34] sm:$0xf]
    %v67 = vld [vmem:[#allocation2 + $0x38] sm:$0xf]
    %v68 = vld [vmem:[#allocation2 + $0x3c] sm:$0xf]
    %v69 = vld [vmem:[%s2] sm:$0x1]
    %v70 = vpack.c.bf16 %v52, %v52
    %v72 = vperm.slane %v69, 0
    %v90 = vunpack.c.l.b16 %v53
    %v91 = vunpack.c.l.b16 %v54
    %v92 = vunpack.c.l.b16 %v55
    %v93 = vunpack.c.l.b16 %v56
    %v94 = vunpack.c.l.b16 %v57
    %v95 = vunpack.c.l.b16 %v58
    %v96 = vunpack.c.l.b16 %v59
    %v97 = vunpack.c.l.b16 %v60
    %v98 = vunpack.c.l.b16 %v61
    %v99 = vunpack.c.l.b16 %v62
    %v100 = vunpack.c.l.b16 %v63
    %v101 = vunpack.c.l.b16 %v64
    %v102 = vunpack.c.l.b16 %v65
    %v103 = vunpack.c.l.b16 %v66
    %v104 = vunpack.c.l.b16 %v67
    %v105 = vunpack.c.l.b16 %v68
    %v106 = vpack.c.b16 %v91, %v90
    %v107 = vpack.c.b16 %v93, %v92
    %v108 = vpack.c.b16 %v95, %v94
    %v109 = vpack.c.b16 %v97, %v96
    %v110 = vpack.c.b16 %v99, %v98
    %v111 = vpack.c.b16 %v101, %v100
    %v112 = vpack.c.b16 %v103, %v102
    %v113 = vpack.c.b16 %v105, %v104
    %122 = vmatpush.bf16.msra.mxu0 %v113
    %123 = vmatpush.bf16.msra.mxu0 %v112
    %124 = vmatpush.bf16.msra.mxu0 %v111
    %125 = vmatpush.bf16.msra.mxu0 %v110
    %126 = vmatpush.bf16.msra.mxu0 %v109
    %127 = vmatpush.bf16.msra.mxu0 %v108
    %128 = vmatpush.bf16.msra.mxu0 %v107
    %129 = vmatpush.bf16.msra.mxu0 %v106
    %130 = vmatmul.bf16.gmra.mxu0 %v70
    %v131 = vpop.f32.mrf.mxu0
    %v132 = vadd.f32 %v72, %v131
    %v133 = vpop.f32.mrf.mxu0
    %134 = vdwg.mxu0
    %v135 = vmax.f32 %v132, 0.0
    %v136 = vld [vmem:[#allocation4] sm:$0xf]
    %v137 = vld [vmem:[#allocation4 + $0x4] sm:$0xf]
    %v138 = vld [vmem:[#allocation4 + $0x8] sm:$0xf]
    %v139 = vld [vmem:[#allocation4 + $0xc] sm:$0xf]
    %v140 = vld [vmem:[#allocation4 + $0x10] sm:$0xf]
    %v141 = vld [vmem:[#allocation4 + $0x14] sm:$0xf]
    %v142 = vld [vmem:[#allocation4 + $0x18] sm:$0xf]
    %v143 = vld [vmem:[#allocation4 + $0x1c] sm:$0xf]
    %v144 = vld [vmem:[#allocation4 + $0x20] sm:$0xf]
    %v145 = vld [vmem:[#allocation4 + $0x24] sm:$0xf]
    %v146 = vld [vmem:[#allocation4 + $0x28] sm:$0xf]
    %v147 = vld [vmem:[#allocation4 + $0x2c] sm:$0xf]
    %v148 = vld [vmem:[#allocation4 + $0x30] sm:$0xf]
    %v149 = vld [vmem:[#allocation4 + $0x34] sm:$0xf]
    %v150 = vld [vmem:[#allocation4 + $0x38] sm:$0xf]
    %v151 = vld [vmem:[#allocation4 + $0x3c] sm:$0xf]
    %v152 = vld [vmem:[%s4] sm:$0x1]
    %v153 = vpack.c.bf16 %v135, %v135
    %v155 = vperm.slane %v152, 0
    %v173 = vunpack.c.l.b16 %v136
    %v174 = vunpack.c.l.b16 %v137
    %v175 = vunpack.c.l.b16 %v138
    %v176 = vunpack.c.l.b16 %v139
    %v177 = vunpack.c.l.b16 %v140
    %v178 = vunpack.c.l.b16 %v141
    %v179 = vunpack.c.l.b16 %v142
    %v180 = vunpack.c.l.b16 %v143
    %v181 = vunpack.c.l.b16 %v144
    %v182 = vunpack.c.l.b16 %v145
    %v183 = vunpack.c.l.b16 %v146
    %v184 = vunpack.c.l.b16 %v147
    %v185 = vunpack.c.l.b16 %v148
    %v186 = vunpack.c.l.b16 %v149
    %v187 = vunpack.c.l.b16 %v150
    %v188 = vunpack.c.l.b16 %v151
    %v189 = vpack.c.b16 %v174, %v173
    %v190 = vpack.c.b16 %v176, %v175
    %v191 = vpack.c.b16 %v178, %v177
    %v192 = vpack.c.b16 %v180, %v179
    %v193 = vpack.c.b16 %v182, %v181
    %v194 = vpack.c.b16 %v184, %v183
    %v195 = vpack.c.b16 %v186, %v185
    %v196 = vpack.c.b16 %v188, %v187
    %205 = vmatpush.bf16.msra.mxu0 %v196
    %206 = vmatpush.bf16.msra.mxu0 %v195
    %207 = vmatpush.bf16.msra.mxu0 %v194
    %208 = vmatpush.bf16.msra.mxu0 %v193
    %209 = vmatpush.bf16.msra.mxu0 %v192
    %210 = vmatpush.bf16.msra.mxu0 %v191
    %211 = vmatpush.bf16.msra.mxu0 %v190
    %212 = vmatpush.bf16.msra.mxu0 %v189
    %213 = vmatmul.bf16.gmra.mxu0 %v153
    %v214 = vpop.f32.mrf.mxu0
    %v215 = vadd.f32 %v155, %v214
    %v216 = vpop.f32.mrf.mxu0
    %217 = vdwg.mxu0
    %218 = vst [vmem:[%s5] sm:$0xff] %v215
    // Predicated region
    $region30: #{mlp_forward.1} parent=1 // pred_check
      _
    $region31: #{mlp_forward.1} parent=1 // pred_check_branch
      %220 = sbr.rel (0) target = $region33
    $region32: #{mlp_forward.1} parent=1 // pred_region
      _
    $region33: #{mlp_forward.1} parent=1 // pred_fallthru
      _
    // Predicated region
    $region34: #{mlp_forward.1} parent=1 // pred_check
      _
    $region35: #{mlp_forward.1} parent=1 // pred_check_branch
      %222 = sbr.rel (0) target = $region37
    $region36: #{mlp_forward.1} parent=1 // pred_region
      _
    $region37: #{mlp_forward.1} parent=1 // pred_fallthru
      _
    %223 = vsyncpa [#allocation3], 1
    %224 = vsyncpa [#allocation5], 1

</llo_original>
